<compile_context>
chip_gen: v7x
topology: tpu7x:2x2x1
jax: 0.10.0
libtpu: 0.0.40
codegen_flags: <defaults>
</compile_context>

<pallas_src>
import functools

import numpy as np
import jax
import jax.numpy as jnp
from jax import lax
from jax.experimental import pallas as pl
from jax.experimental.pallas import tpu as pltpu


# -----------------------------------------------------------------------------
# "config.vocab" constants (deterministic, in-script; no checkpoint load)
# -----------------------------------------------------------------------------
PAD_IDX = 0
EOS_IDX = 2
VOCAB_SIZE = 32

EOS_WEIGHT = 20.0
PATTERN_WEIGHT = 2.0
SEQUENCE_WEIGHT = 0.5

# Tokens per grid step. 8192 rows * 32 vocab * 4 B = 1 MiB per input block
# (2 MiB double-buffered) -> DMA time dominates the ~0.35 us per-step pipeline
# overhead while staying far below the scoped-VMEM budget on v5e/v6e/v7x.
_ROW_TILE = 8192


# -----------------------------------------------------------------------------
# Pallas kernel: per-token statistics over the vocab (sublane) axis
# -----------------------------------------------------------------------------
def _row_stats_kernel(logits_ref, tgt_ref, out_ref, *, eos_idx, pad_idx):
    """Per-token vocab-axis statistics.

    logits_ref: (V, TR)  bf16/f32, vocab on sublanes, tokens on lanes
    tgt_ref:    (1, TR)  int32
    out_ref:    (4, TR)  f32: [ce, eos_logit, max_non_eos, argmax (as f32)]
    """
    x = logits_ref[...].astype(jnp.float32)      # in-kernel upcast (free VPU slot)
    t = tgt_ref[...]                             # (1, TR) int32
    V = x.shape[0]

    vids = lax.broadcasted_iota(jnp.int32, x.shape, 0)   # vocab id per sublane row

    # EOS logit and max over all non-EOS classes (single reduction over V).
    eos_logit = x[eos_idx:eos_idx + 1, :]                               # (1, TR)
    max_other = jnp.max(jnp.where(vids == eos_idx, jnp.float32(-1e30), x),
                        axis=0, keepdims=True)                          # (1, TR)

    # Full row max derived elementwise -> one fewer cross-vocab reduction.
    m = jnp.maximum(max_other, eos_logit)                               # (1, TR)

    # Numerically stable log-sum-exp and target-class logit.
    lse = m + jnp.log(jnp.sum(jnp.exp(x - m), axis=0, keepdims=True))
    logit_t = jnp.sum(jnp.where(vids == t, x, 0.0), axis=0, keepdims=True)

    # Cross-entropy per token, masked for ignore_index == pad_idx.
    ce = jnp.where(t != pad_idx, lse - logit_t, 0.0)

    # Argmax over vocab (first maximal index).
    pred = jnp.min(jnp.where(x == m, vids, jnp.int32(V)), axis=0, keepdims=True)

    # Lane-dense stores into the single packed output block.
    out_ref[0:1, :] = ce
    out_ref[1:2, :] = eos_logit
    out_ref[2:3, :] = max_other
    out_ref[3:4, :] = pred.astype(jnp.float32)   # V <= 2^24 -> exact in f32


def _pick_row_tiling(n_rows, max_rows=_ROW_TILE):
    """Returns (row_tile, padded_rows). Keeps padding waste < 128 rows/tile."""
    if n_rows <= max_rows:
        return n_rows, n_rows                       # single full-extent block
    n_tiles = -(-n_rows // max_rows)                # ceil
    per_tile = -(-n_rows // n_tiles)                # ceil
    tile = -(-per_tile // 128) * 128                # round up to lane multiple
    return tile, tile * n_tiles


def eos_row_stats(logits, targets, *, eos_idx, pad_idx):
    """Runs the Pallas kernel.

    Returns (ce[B,S], predictions[B,S], eos_logit[B,S], max_other[B,S]).
    """
    B, S, V = logits.shape
    R = B * S

    # Layout flip: tokens -> lanes, vocab -> sublanes. Pure layout transpose
    # (keeps bf16 as bf16; no f32 copy of the logits is ever written to HBM).
    xt = jnp.transpose(logits.reshape(R, V), (1, 0))        # (V, R)
    tt = targets.reshape(1, R).astype(jnp.int32)            # (1, R)

    tile, r_pad = _pick_row_tiling(R)
    if r_pad != R:
        xt = jnp.pad(xt, ((0, 0), (0, r_pad - R)))
        tt = jnp.pad(tt, ((0, 0), (0, r_pad - R)), constant_values=pad_idx)

    kernel = functools.partial(_row_stats_kernel, eos_idx=eos_idx, pad_idx=pad_idx)
    out = pl.pallas_call(
        kernel,
        out_shape=jax.ShapeDtypeStruct((4, r_pad), jnp.float32),
        grid_spec=pltpu.PrefetchScalarGridSpec(
            num_scalar_prefetch=0,
            grid=(r_pad // tile,),
            in_specs=[
                pl.BlockSpec((V, tile), lambda i: (0, i)),
                pl.BlockSpec((1, tile), lambda i: (0, i)),
            ],
            out_specs=pl.BlockSpec((4, tile), lambda i: (0, i)),
        ),
        compiler_params=pltpu.CompilerParams(
            dimension_semantics=("parallel",),       # v7x: shard rows over both TCs
            vmem_limit_bytes=32 * 1024 * 1024,       # explicit; tiles use only a few MiB
        ),
    )(xt, tt)

    ce = out[0, :R].reshape(B, S)
    eos_logit = out[1, :R].reshape(B, S)
    max_other = out[2, :R].reshape(B, S)
    predictions = out[3, :R].astype(jnp.int32).reshape(B, S)
    return ce, predictions, eos_logit, max_other


# -----------------------------------------------------------------------------
# Host-side repetitive-pattern detection (same Python algorithm as the module)
# -----------------------------------------------------------------------------
def detect_repetitive_patterns(sequences, pad_idx):
    sequences = np.asarray(sequences)
    repetitive_count = 0
    for seq in sequences:
        tokens = []
        for token in seq:
            if int(token) == pad_idx:
                break
            tokens.append(int(token))
        if len(tokens) < 6:
            continue
        is_repetitive = False
        for pattern_len in range(2, min(5, len(tokens) // 3)):
            for start in range(len(tokens) - pattern_len * 2):
                pattern = tokens[start:start + pattern_len]
                repeats = 1
                pos = start + pattern_len
                while pos + pattern_len <= len(tokens):
                    if tokens[pos:pos + pattern_len] == pattern:
                        repeats += 1
                        pos += pattern_len
                    else:
                        break
                if repeats >= 3:
                    is_repetitive = True
                    break
            if is_repetitive:
                break
        if is_repetitive:
            repetitive_count += 1
    return repetitive_count


# -----------------------------------------------------------------------------
# Device-side portion of the forward pass (fully jittable)
# -----------------------------------------------------------------------------
@functools.partial(
    jax.jit,
    static_argnames=("eos_idx", "pad_idx", "eos_weight", "sequence_weight"))
def _device_loss(logits, targets, *, eos_idx, pad_idx, eos_weight, sequence_weight):
    B, S, V = logits.shape
    ce, predictions, eos_logit, max_other = eos_row_stats(
        logits, targets, eos_idx=eos_idx, pad_idx=pad_idx)

    # Main cross-entropy loss (mean over non-ignored tokens).
    valid = targets != pad_idx
    n_valid = jnp.sum(valid).astype(jnp.float32)
    main_loss = jnp.sum(ce) / n_valid

    # EOS encouragement loss.
    eos_mask = targets == eos_idx
    has_eos = jnp.any(eos_mask, axis=1)
    first_pos = jnp.argmax(eos_mask, axis=1)
    batch_ix = jnp.arange(B)
    eos_logit_at = eos_logit[batch_ix, first_pos]
    max_other_at = max_other[batch_ix, first_pos]
    margin = jnp.maximum(max_other_at - eos_logit_at + 1.0, 0.0)
    eos_loss = jnp.sum(jnp.where(has_eos, margin, 0.0)) / max(B, 1)
    pred_at = predictions[batch_ix, first_pos]
    eos_predictions = jnp.sum(
        jnp.where(has_eos, (pred_at == eos_idx).astype(jnp.int32), 0))
    eos_targets = jnp.sum(has_eos.astype(jnp.int32))
    eos_success_rate = eos_predictions / jnp.maximum(eos_targets, 1)

    # Length penalty (NB: divides by avg_target_length like the reference;
    # NaN if a batch is entirely padding -- same hazard as the PyTorch module).
    avg_pred_length = jnp.mean(
        jnp.sum((predictions != pad_idx).astype(jnp.float32), axis=1))
    avg_target_length = jnp.mean(
        jnp.sum((targets != pad_idx).astype(jnp.float32), axis=1))
    length_penalty = jnp.abs(avg_pred_length - avg_target_length) / avg_target_length

    loss_wo_pattern = (main_loss
                       + eos_weight * eos_loss
                       + sequence_weight * length_penalty)
    return {
        'loss_wo_pattern': loss_wo_pattern,
        'main_loss': main_loss,
        'eos_loss': eos_loss,
        'length_penalty': length_penalty,
        'eos_success_rate': eos_success_rate,
        'eos_predictions': eos_predictions,
        'eos_targets': eos_targets,
        'predictions': predictions,
    }


# -----------------------------------------------------------------------------
# Forward pass (mirrors EOSFocusedLoss.forward)
# -----------------------------------------------------------------------------
def eos_focused_loss_forward(logits, targets, *,
                             eos_idx=EOS_IDX, pad_idx=PAD_IDX,
                             eos_weight=EOS_WEIGHT,
                             pattern_weight=PATTERN_WEIGHT,
                             sequence_weight=SEQUENCE_WEIGHT):
    B, S, V = logits.shape
    tB, tS = targets.shape
    if S != tS:
        min_len = min(S, tS)
        logits = logits[:, :min_len, :]
        targets = targets[:, :min_len]

    dev = _device_loss(logits, targets.astype(jnp.int32),
                       eos_idx=int(eos_idx), pad_idx=int(pad_idx),
                       eos_weight=float(eos_weight),
                       sequence_weight=float(sequence_weight))

    # Single host sync AFTER all device work has been dispatched.
    # TODO(synk): the nested data-dependent while-loop pattern matcher has no
    # clean Pallas/JAX equivalent (the reference uses .item()); it stays
    # host-side on the fetched predictions.
    predictions_host = np.asarray(jax.device_get(dev['predictions']))
    repetitive_count = detect_repetitive_patterns(predictions_host, pad_idx)
    pattern_loss = repetitive_count / B * 100.0

    total_loss = dev['loss_wo_pattern'] + pattern_weight * pattern_loss
    return {
        'total_loss': total_loss,
        'main_loss': dev['main_loss'],
        'eos_loss': dev['eos_loss'],
        'pattern_loss': pattern_loss,
        'length_penalty': dev['length_penalty'],
        'eos_success_rate': dev['eos_success_rate'],
        'eos_predictions': dev['eos_predictions'],
        'eos_targets': dev['eos_targets'],
        'repetitive_count': repetitive_count,
    }


# -----------------------------------------------------------------------------
# Demo
# -----------------------------------------------------------------------------
if __name__ == "__main__":
    B, S, V = 2, 8, VOCAB_SIZE
    key = jax.random.PRNGKey(0)
    logits = jax.random.normal(key, (B, S, V), dtype=jnp.float32)

    # targets: sequences with an EOS (=2) then PAD (=0); tokens within vocab
    targets = jnp.array([
        [5, 6, 7, 2, 0, 0, 0, 0],
        [4, 4, 4, 4, 4, 4, 2, 0],
    ], dtype=jnp.int32)

    out = eos_focused_loss_forward(logits, targets)
    jax.block_until_ready(out['total_loss'])

    print("KERNEL_OK")
</pallas_src>

<mosaic_0001>
module attributes {stable_mosaic.version = 11 : i64} {
  func.func @_row_stats_kernel(%arg0: i32, %arg1: memref<32x16xf32, #tpu.memory_space<vmem>>, %arg2: memref<1x16xi32, #tpu.memory_space<vmem>>, %arg3: memref<4x16xf32, #tpu.memory_space<vmem>>) attributes {dimension_semantics = [#tpu.dimension_semantics<parallel>], iteration_bounds = array<i64: 1>, scalar_prefetch = 0 : i64, scratch_operands = 0 : i64, tpu.core_type = #tpu.core_type<tc>, window_params = [{transform_indices = @transform_0, window_bounds = array<i64: 32, 16>}, {transform_indices = @transform_1, window_bounds = array<i64: 1, 16>}, {transform_indices = @transform_2, window_bounds = array<i64: 4, 16>}]} {
    %c0 = arith.constant 0 : index
    %c0_0 = arith.constant 0 : index
    %0 = vector.load %arg1[%c0, %c0_0] : memref<32x16xf32, #tpu.memory_space<vmem>>, vector<32x16xf32>
    %c0_1 = arith.constant 0 : index
    %c0_2 = arith.constant 0 : index
    %1 = vector.load %arg2[%c0_1, %c0_2] : memref<1x16xi32, #tpu.memory_space<vmem>>, vector<1x16xi32>
    %2 = tpu.iota {dimensions = array<i32: 0>} : vector<32x16xi32>
    %3 = vector.extract_strided_slice %0 {offsets = [2, 0], sizes = [1, 16], strides = [1, 1]} : vector<32x16xf32> to vector<1x16xf32>
    %c2_i32 = arith.constant 2 : i32
    %4 = vector.broadcast %c2_i32 : i32 to vector<32x16xi32>
    %5 = arith.cmpi eq, %2, %4 : vector<32x16xi32>
    %cst = arith.constant -1.000000e+30 : f32
    %6 = vector.broadcast %cst : f32 to vector<32x16xf32>
    %7 = arith.select %5, %6, %0 : vector<32x16xi1>, vector<32x16xf32>
    %cst_3 = arith.constant dense<0xFF800000> : vector<16xf32>
    %8 = vector.multi_reduction <maximumf>, %7, %cst_3 [0] : vector<32x16xf32> to vector<16xf32>
    %9 = vector.shape_cast %8 : vector<16xf32> to vector<1x16xf32>
    %10 = arith.maximumf %9, %3 : vector<1x16xf32>
    %11 = vector.broadcast %10 : vector<1x16xf32> to vector<32x16xf32>
    %12 = arith.subf %0, %11 : vector<32x16xf32>
    %13 = math.exp %12 : vector<32x16xf32>
    %cst_4 = arith.constant dense<0.000000e+00> : vector<16xf32>
    %14 = vector.multi_reduction <add>, %13, %cst_4 [0] : vector<32x16xf32> to vector<16xf32>
    %15 = vector.shape_cast %14 : vector<16xf32> to vector<1x16xf32>
    %16 = math.log %15 : vector<1x16xf32>
    %17 = arith.addf %10, %16 : vector<1x16xf32>
    %18 = vector.broadcast %1 : vector<1x16xi32> to vector<32x16xi32>
    %19 = arith.cmpi eq, %2, %18 : vector<32x16xi32>
    %cst_5 = arith.constant 0.000000e+00 : f32
    %20 = vector.broadcast %cst_5 : f32 to vector<32x16xf32>
    %21 = arith.select %19, %0, %20 : vector<32x16xi1>, vector<32x16xf32>
    %cst_6 = arith.constant dense<0.000000e+00> : vector<16xf32>
    %22 = vector.multi_reduction <add>, %21, %cst_6 [0] : vector<32x16xf32> to vector<16xf32>
    %23 = vector.shape_cast %22 : vector<16xf32> to vector<1x16xf32>
    %c0_i32 = arith.constant 0 : i32
    %24 = vector.broadcast %c0_i32 : i32 to vector<1x16xi32>
    %25 = arith.cmpi ne, %1, %24 : vector<1x16xi32>
    %26 = arith.subf %17, %23 : vector<1x16xf32>
    %cst_7 = arith.constant 0.000000e+00 : f32
    %27 = vector.broadcast %cst_7 : f32 to vector<1x16xf32>
    %28 = arith.select %25, %26, %27 : vector<1x16xi1>, vector<1x16xf32>
    %29 = vector.broadcast %10 : vector<1x16xf32> to vector<32x16xf32>
    %30 = arith.cmpf oeq, %0, %29 : vector<32x16xf32>
    %c32_i32 = arith.constant 32 : i32
    %31 = vector.broadcast %c32_i32 : i32 to vector<32x16xi32>
    %32 = arith.select %30, %2, %31 : vector<32x16xi1>, vector<32x16xi32>
    %cst_8 = arith.constant dense<2147483647> : vector<16xi32>
    %33 = vector.multi_reduction <minsi>, %32, %cst_8 [0] : vector<32x16xi32> to vector<16xi32>
    %34 = vector.shape_cast %33 : vector<16xi32> to vector<1x16xi32>
    %c0_9 = arith.constant 0 : index
    %c0_10 = arith.constant 0 : index
    %35 = vector.load %arg3[%c0_9, %c0_10] : memref<4x16xf32, #tpu.memory_space<vmem>>, vector<1x16xf32>
    tpu.vector_store %arg3[%c0_9, %c0_10], %28 {strides = array<i32>} : memref<4x16xf32, #tpu.memory_space<vmem>>, vector<1x16xf32>,
    %c1 = arith.constant 1 : index
    %c0_11 = arith.constant 0 : index
    %36 = vector.load %arg3[%c1, %c0_11] : memref<4x16xf32, #tpu.memory_space<vmem>>, vector<1x16xf32>
    tpu.vector_store %arg3[%c1, %c0_11], %3 {strides = array<i32>} : memref<4x16xf32, #tpu.memory_space<vmem>>, vector<1x16xf32>,
    %c2 = arith.constant 2 : index
    %c0_12 = arith.constant 0 : index
    %37 = vector.load %arg3[%c2, %c0_12] : memref<4x16xf32, #tpu.memory_space<vmem>>, vector<1x16xf32>
    tpu.vector_store %arg3[%c2, %c0_12], %9 {strides = array<i32>} : memref<4x16xf32, #tpu.memory_space<vmem>>, vector<1x16xf32>,
    %38 = arith.sitofp %34 : vector<1x16xi32> to vector<1x16xf32>
    %c3 = arith.constant 3 : index
    %c0_13 = arith.constant 0 : index
    %39 = vector.load %arg3[%c3, %c0_13] : memref<4x16xf32, #tpu.memory_space<vmem>>, vector<1x16xf32>
    tpu.vector_store %arg3[%c3, %c0_13], %38 {strides = array<i32>} : memref<4x16xf32, #tpu.memory_space<vmem>>, vector<1x16xf32>,
    return
  }
  func.func @transform_0(%arg0: i32) -> (i32, i32) {
    %c0_i32 = arith.constant 0 : i32
    %c0_i32_0 = arith.constant 0 : i32
    return %c0_i32, %arg0 : i32, i32
  }
  func.func @transform_1(%arg0: i32) -> (i32, i32) {
    %c0_i32 = arith.constant 0 : i32
    %c0_i32_0 = arith.constant 0 : i32
    return %c0_i32, %arg0 : i32, i32
  }
  func.func @transform_2(%arg0: i32) -> (i32, i32) {
    %c0_i32 = arith.constant 0 : i32
    %c0_i32_0 = arith.constant 0 : i32
    return %c0_i32, %arg0 : i32, i32
  }
}

</mosaic_0001>

<llo_original>
// kernel: squeeze.5
$region0: #{squeeze.5}
  %s0 = inlined_call_operand.vmem [shape: f32[16], index: 0, kind: input, shape index: {}]
  %s1 = inlined_call_operand.vmem [shape: f32[2,8], index: 1, kind: output, shape index: {}]
  $region1: #{squeeze.5} parent=0
    #allocation0 [shape = 'u8[4096]{0}', space=vmem, size = 0x1000, scoped, tag = 'scoped mem for output reshape']
    #allocation1 [shape = 'u8[4096]{0}', space=vmem, size = 0x1000, scoped, tag = 'scoped mem for input reshape']
    %s3 = sshllo.u32 0, 1
    %v4 = vld [vmem:[%s0] sm:%s3]
    %5 = vst [vmem:[#allocation1] sm:%s3] %v4
    %v6 = vld [vmem:[#allocation1] sm:$0x1]
    %vm7 = vcmask 64512
    %8 = vst.msk [vmem:[#allocation0] sm:$0x1] %vm7, %v6
    %v9 = vld [vmem:[#allocation1] sm:$0x1]
    %10 = vrot.lane.b32.xlu0 %v9, 120
    %v11 = vpop.permute.xlu0 %10
    %vm12 = vcmask 64512
    %s13 = scalar_lea.vmem [#allocation0], 1
    %14 = vst.msk [vmem:[%s13] sm:$0x1] %vm12, %v11
    %s16 = sshllo.u32 0, 2
    %v18 = vld [vmem:[#allocation0] sm:%s16]
    %s19 = sshllo.u32 0, 2
    %20 = vst [vmem:[%s1] sm:%s19] %v18

// kernel: _device_loss.1
$region0: #{_device_loss.1}
  #allocation0 [shape = 'u32[]', space=smem, size = 0x4, offset = 0x4, fixed_abs, tag = 'smem constant byte address 0x4 - core index']
  #allocation1 [shape = 'u32[144,128]{1,0:T(1,128)}', space=vmem, size = 0x12000, scoped, tag = 'internal scratch']
  %s0 = inlined_call_operand.vmem [shape: f32[32,16], index: 0, kind: input, shape index: {}]
  %s1 = inlined_call_operand.vmem [shape: s32[1,16], index: 1, kind: input, shape index: {}]
  %s2 = inlined_call_operand.vmem [shape: f32[4,16], index: 2, kind: output, shape index: {}]
  %s3 = sld [smem:[#allocation0]]
  $region18: #{_device_loss.1} parent=0
    _
  %s5 = ssub.s32 1, %s3
  %s6 = scalar_select 0, %s5, %s3
  // Predicated region
  $region2: #{_device_loss.1} parent=0 // pred_check
    _
  $region3: #{_device_loss.1} parent=0 // pred_check_branch
    %8 = sbr.rel (0) target = $region5
  $region4: #{_device_loss.1} parent=0 // pred_region
    _
  $region5: #{_device_loss.1} parent=0 // pred_fallthru
    _
  // Predicated region
  $region6: #{_device_loss.1} parent=0 // pred_check
    _
  $region7: #{_device_loss.1} parent=0 // pred_check_branch
    %10 = sbr.rel (0) target = $region9
  $region8: #{_device_loss.1} parent=0 // pred_region
    _
  $region9: #{_device_loss.1} parent=0 // pred_fallthru
    _
  %v11 = vld [vmem:[%s0] sm:$0xff]
  %v12 = vld [vmem:[%s0 + $0x8] sm:$0xff]
  %v13 = vld [vmem:[%s0 + $0x10] sm:$0xff]
  %v14 = vld [vmem:[%s0 + $0x18] sm:$0xff]
  %v15 = vld [vmem:[%s1] sm:$0x1]
  %v16 = vlaneseq
  %v17 = vshrl.u32 %v16, 7
  %v18 = vadd.s32 %v17, 8
  %v19 = vadd.s32 %v17, 16
  %v20 = vadd.s32 %v17, 24
  %vm21 = vcmp.eq.s32.totalorder %v17, 2
  %vm22 = vcmp.eq.s32.totalorder %v18, 2
  %vm23 = vcmp.eq.s32.totalorder %v19, 2
  %vm24 = vcmp.eq.s32.totalorder %v20, 2
  %v25 = vsel %vm21, -1e+30, %v11
  %v26 = vsel %vm22, -1e+30, %v12
  %v27 = vsel %vm23, -1e+30, %v13
  %v28 = vsel %vm24, -1e+30, %v14
  %vm29 = vcmask 130048
  %v30 = vsel %vm29, %v25, -inf
  %v31 = vsel %vm29, %v26, -inf
  %v32 = vsel %vm29, %v27, -inf
  %v33 = vsel %vm29, %v28, -inf
  %v34 = vmax.f32 %v30, %v31
  %v35 = vmax.f32 %v32, %v33
  %v36 = vmax.f32 %v34, %v35
  %v37 = vrot.slane %v36, 4
  %v38 = vmax.f32 %v36, %v37
  %v39 = vrot.slane %v38, 2
  %v40 = vmax.f32 %v38, %v39
  %v41 = vrot.slane %v40, 1
  %v42 = vmax.f32 %v40, %v41
  %v43 = vmax.f32 %v42, %v11
  %v44 = vlaneseq
  %v45 = vshrl.u32 %v44, 7
  %v46 = vsub.s32 2, %v45
  %v47 = vrot.slane %v43, %v46
  %v48 = vsub.f32 %v11, %v47
  %v49 = vsub.f32 %v12, %v47
  %v50 = vsub.f32 %v13, %v47
  %v51 = vsub.f32 %v14, %v47
  %v52 = vmul.f32 %v48, 1.442695
  %v53 = vpow.pop %v52
  %v54 = vmul.f32 %v49, 1.442695
  %v55 = vpow.pop %v54
  %v56 = vmul.f32 %v50, 1.442695
  %v57 = vpow.pop %v56
  %v58 = vmul.f32 %v51, 1.442695
  %v59 = vpow.pop %v58
  %v60 = vsel %vm29, %v53, 0.0
  %v61 = vsel %vm29, %v55, 0.0
  %v62 = vadd.f32 %v60, %v61
  %v63 = vsel %vm29, %v57, 0.0
  %v64 = vadd.f32 %v62, %v63
  %v65 = vsel %vm29, %v59, 0.0
  %v66 = vadd.f32 %v64, %v65
  %v67 = vrot.slane %v66, 4
  %v68 = vadd.f32 %v66, %v67
  %v69 = vrot.slane %v68, 2
  %v70 = vadd.f32 %v68, %v69
  %v71 = vrot.slane %v70, 1
  %v72 = vadd.f32 %v70, %v71
  %v73 = vlog2.pop %v72
  %v74 = vmul.f32 %v73, 0.6931472
  %v75 = vadd.f32 %v43, %v74
  %v76 = vlaneseq
  %v77 = vshrl.u32 %v76, 7
  %v78 = vsub.s32 0, %v77
  %v79 = vrot.slane %v15, %v78
  %vm80 = vcmp.eq.s32.totalorder %v17, %v79
  %vm81 = vcmp.eq.s32.totalorder %v18, %v79
  %vm82 = vcmp.eq.s32.totalorder %v19, %v79
  %vm83 = vcmp.eq.s32.totalorder %v20, %v79
  %v84 = vsel %vm80, %v11, 0.0
  %v85 = vsel %vm81, %v12, 0.0
  %v86 = vsel %vm82, %v13, 0.0
  %v87 = vsel %vm83, %v14, 0.0
  %v88 = vsel %vm29, %v84, 0.0
  %v89 = vsel %vm29, %v85, 0.0
  %v90 = vadd.f32 %v88, %v89
  %v91 = vsel %vm29, %v86, 0.0
  %v92 = vadd.f32 %v90, %v91
  %v93 = vsel %vm29, %v87, 0.0
  %v94 = vadd.f32 %v92, %v93
  %v95 = vrot.slane %v94, 4
  %v96 = vadd.f32 %v94, %v95
  %v97 = vrot.slane %v96, 2
  %v98 = vadd.f32 %v96, %v97
  %v99 = vrot.slane %v98, 1
  %v100 = vadd.f32 %v98, %v99
  %vm101 = vcmp.ne.s32.totalorder %v15, 0
  %v102 = vsub.f32 %v75, %v100
  %v105 = vunpack.c.l.s4 1966171168
  %v106 = vunpack.c.0.s8 %v105
  %v107 = vlaneseq
  %v108 = vshrl.u32 %v107, 7
  %v109 = vsub.s32 %v106, %v108
  %v110 = vrot.slane %v102, %v109
  %v112 = vunpack.c.l.s4 1966171168
  %v113 = vunpack.c.0.s8 %v112
  %v114 = vlaneseq
  %v115 = vshrl.u32 %v114, 7
  %v116 = vsub.s32 %v113, %v115
  %v117 = vrot.slane %v110, %v116
  %v118 = vcombine.high %v117, %v117
  %v120 = vsel %vm101, %v118, 0.0
  %vm121 = vcmp.eq.f32.partialorder %v11, %v47
  %vm122 = vcmp.eq.f32.partialorder %v12, %v47
  %vm123 = vcmp.eq.f32.partialorder %v13, %v47
  %vm124 = vcmp.eq.f32.partialorder %v14, %v47
  %v125 = vsel %vm121, %v17, 32
  %v126 = vsel %vm122, %v18, 32
  %v127 = vsel %vm123, %v19, 32
  %v128 = vsel %vm124, %v20, 32
  %v129 = vsel %vm29, %v125, 2147483647
  %v130 = vsel %vm29, %v126, 2147483647
  %v131 = vsel %vm29, %v127, 2147483647
  %v132 = vsel %vm29, %v128, 2147483647
  %vm133 = vcmp.lt.s32.totalorder %v129, %v130
  %v134 = vsel %vm133, %v129, %v130
  %vm135 = vcmp.lt.s32.totalorder %v131, %v132
  %v136 = vsel %vm135, %v131, %v132
  %vm137 = vcmp.lt.s32.totalorder %v134, %v136
  %v138 = vsel %vm137, %v134, %v136
  %v139 = vrot.slane %v138, 4
  %vm140 = vcmp.lt.s32.totalorder %v138, %v139
  %v141 = vsel %vm140, %v138, %v139
  %v142 = vrot.slane %v141, 2
  %vm143 = vcmp.lt.s32.totalorder %v141, %v142
  %v144 = vsel %vm143, %v141, %v142
  %v145 = vrot.slane %v144, 1
  %vm146 = vcmp.lt.s32.totalorder %v144, %v145
  %v147 = vsel %vm146, %v144, %v145
  %vm148 = vcmask 122880
  %149 = vst.msk [vmem:[%s2] sm:$0x1] %vm148, %v120
  %vm150 = vcmask 124930
  %151 = vst.msk [vmem:[%s2 - $0x1] sm:$0x4] %vm150, %v11
  %152 = vst.msk [vmem:[%s2 + $0x2] sm:$0x1] %vm148, %v42
  %v153 = vcvt.s32.f32 %v147
  %154 = vst.msk [vmem:[%s2 + $0x3] sm:$0x1] %vm148, %v153
  // Predicated region
  $region10: #{_device_loss.1} parent=0 // pred_check
    _
  $region11: #{_device_loss.1} parent=0 // pred_check_branch
    %156 = sbr.rel (0) target = $region13
  $region12: #{_device_loss.1} parent=0 // pred_region
    _
  $region13: #{_device_loss.1} parent=0 // pred_fallthru
    _
  // Predicated region
  $region14: #{_device_loss.1} parent=0 // pred_check
    _
  $region15: #{_device_loss.1} parent=0 // pred_check_branch
    %158 = sbr.rel (0) target = $region17
  $region16: #{_device_loss.1} parent=0 // pred_region
    _
  $region17: #{_device_loss.1} parent=0 // pred_fallthru
    _

</llo_original>
